<compile_context>
chip_gen: v6e
topology: v6e:2x2x1
jax: 0.10.0
libtpu: 0.0.40
codegen_flags: <defaults>
</compile_context>

<pallas_src>
import jax
import jax.numpy as jnp
import numpy as np
from jax.experimental import pallas as pl
from jax.experimental.pallas import tpu as pltpu

# ----------------------- configuration (small synthetic sizes) -----------------------
B = 2            # batch
N = 16           # num_nodes  (config['capacity'])
OUT_NODES = 8    # config['out_capacity']
T = 8            # input_len  (DLinear Lag)
H = 4            # output_len (DLinear Horizon)
DATA_DIFF = 1    # config['data_diff']
F = 1 + DATA_DIFF        # var_len / feature_dim (original series + diffs)
C_RES = 8        # residual_channels
C_CONV = 8       # conv_channels
GDEP = 2         # gcn_k (MixProp depth)
ALPHA = 0.05     # propalpha
KS = 7           # DLinear moving-average kernel size
C_TOT = (GDEP + 1) * C_RES


# ----------------------------------- Pallas kernel ------------------------------------
def mixprop_dlinear_kernel(xT_ref, aT_ref, a1T_ref, wT_ref, bT_ref, o_ref):
    """Per-batch forward, node axis on lanes.

    xT  : (T*F, N)              bf16  flattened (time, feat) rows, node lanes
    aT  : (N, N)                bf16  transposed row-normalized adjacency (resident)
    a1T : (T*C_RES, T*F)        bf16  start_conv folded over time (transposed)
    wT  : ((GDEP+1)*H, T*C_RES) bf16  per-hop (mlp + DLinear chain) folded weights, stacked
    bT  : (H, 1)                f32   all biases folded
    out : (H, OUT_NODES)        f32
    """
    f32 = jnp.float32
    bf16 = jnp.bfloat16

    # start_conv (1x1 conv over feature dim): bf16 MXU operands, f32 accumulation.
    h0 = jnp.dot(a1T_ref[...], xT_ref[...], preferred_element_type=f32)      # (T*C_RES, N)

    # Project all hop weights at once (the per-hop conv + DLinear chain acts on the feature
    # axis and therefore commutes with the node-axis adjacency recurrence).
    z0 = jnp.dot(wT_ref[...], h0.astype(bf16), preferred_element_type=f32)   # ((GDEP+1)*H, N)

    aT = aT_ref[...]
    acc = z0[0:H, :]                                                          # hop-0 block
    z = z0
    for k in range(1, GDEP + 1):
        # MixProp recurrence on the already-projected (tiny) stacked state, f32 AXPY.
        z = ALPHA * z0 + (1.0 - ALPHA) * jnp.dot(z.astype(bf16), aT,
                                                 preferred_element_type=f32)
        acc = acc + z[k * H:(k + 1) * H, :]

    # Only the last OUT_NODES node columns survive the module epilogue -> store just those.
    o_ref[...] = acc[:, N - OUT_NODES:] + bT_ref[...]                         # (H, OUT_NODES)


# ------------------------------ glue: parameter folding -------------------------------
def _moving_average_matrix():
    """(T, T) matrix M s.t. trend(t_out) = sum_t_in M[t_in, t_out] * y(t_in)
    for a KS-wide moving average with replicate padding."""
    pad = (KS - 1) // 2
    m = np.zeros((T, T), np.float32)
    for t_out in range(T):
        for k in range(KS):
            t_in = min(max(t_out - pad + k, 0), T - 1)
            m[t_in, t_out] += 1.0 / KS
    return jnp.asarray(m)


def build_kernel_params(p):
    """Fold every linear stage of the module into 3 small arrays (transposed, hop-stacked).
    Folding is done in f32; bf16 cast happens at the call site."""
    eye_T = jnp.eye(T, dtype=jnp.float32)
    eye_O = jnp.eye(C_CONV, dtype=jnp.float32)
    eye_H = jnp.eye(H, dtype=jnp.float32)

    # --- start_conv (1x1 conv) folded over time ---
    a1 = jnp.kron(eye_T, p['w_start'].T)                        # (T*F, T*C_RES)
    b_start_row = jnp.tile(p['b_start'], T)[None, :]            # (1, T*C_RES)

    # --- DLinear chain: moving-avg + seasonal/trend Linears + feature1 + feature2 ---
    m_ma = jnp.kron(_moving_average_matrix(), eye_O)            # (T*O, T*O)
    bs = jnp.kron(p['w_s'].T, eye_O)                            # (T*O, H*O)
    bbs = jnp.repeat(p['b_s'], C_CONV)[None, :]
    bt = jnp.kron(p['w_t'].T, eye_O)
    bbt = jnp.repeat(p['b_t'], C_CONV)[None, :]
    bf1 = jnp.kron(eye_H, p['w_f1'].T)                          # (H*O, H*6)
    bbf1 = jnp.tile(p['b_f1'], H)[None, :]
    bf2 = jnp.kron(eye_H, p['w_f2'].T)                          # (H*6, H)
    bbf2 = jnp.tile(p['b_f2'], H)[None, :]

    eye_TO = jnp.eye(T * C_CONV, dtype=jnp.float32)
    cmat = ((eye_TO - m_ma) @ bs + m_ma @ bt) @ bf1 @ bf2       # (T*C_CONV, H)
    cbias = ((bbs + bbt) @ bf1 + bbf1) @ bf2 + bbf2             # (1, H)

    # --- MixProp output 1x1 conv distributed per hop, folded with cmat ---
    wm = p['w_mlp'].T                                           # (C_TOT, C_CONV)
    w_hops = [jnp.kron(eye_T, wm[j * C_RES:(j + 1) * C_RES, :]) @ cmat
              for j in range(GDEP + 1)]                         # each (T*C_RES, H)

    # --- all biases folded; start_conv bias is a fixed point of the row-stochastic A ---
    b_mlp_row = jnp.tile(p['b_mlp'], T)[None, :]                # (1, T*C_CONV)
    bias = b_mlp_row @ cmat + cbias + b_start_row @ sum(w_hops)  # (1, H)

    a1T = a1.T                                                  # (T*C_RES, T*F)
    wallT = jnp.concatenate([w.T for w in w_hops], axis=0)      # ((GDEP+1)*H, T*C_RES)
    biasT = bias.T                                              # (H, 1)
    return a1T, wallT, biasT


def _prepare_input(batch_x):
    """batch_x (B, T, N) -> (B, N, T, F) with data-diff features appended (plain-JAX glue)."""
    x = jnp.transpose(batch_x, (0, 2, 1))[..., None]            # (B, N, T, 1)
    feats = [x]
    prev = x
    for _ in range(DATA_DIFF):
        d = prev[:, :, 1:, :] - prev[:, :, :-1, :]
        d = jnp.concatenate([jnp.zeros((x.shape[0], x.shape[1], 1, 1), x.dtype), d], axis=2)
        feats.append(d)
        prev = d
    return jnp.concatenate(feats, axis=3)                       # (B, N, T, F)


def mixprop_dlinear_pallas(batch_x, adj_mx, p):
    # adjacency normalization in plain-JAX glue; transposed so it right-multiplies
    # the node-on-lanes activations inside the kernel. No block-diagonal kron.
    adj = adj_mx + jnp.eye(N, dtype=adj_mx.dtype)
    a_norm = adj / jnp.sum(adj, axis=1, keepdims=True)          # (N, N), row-stochastic
    aT = a_norm.T.astype(jnp.bfloat16)

    # (B, N, T, F) -> (B, T*F, N): node axis on lanes.
    xT = _prepare_input(batch_x).reshape(B, N, T * F)
    xT = jnp.transpose(xT, (0, 2, 1)).astype(jnp.bfloat16)      # (B, T*F, N)

    a1T, wallT, biasT = build_kernel_params(p)
    a1T = a1T.astype(jnp.bfloat16)
    wallT = wallT.astype(jnp.bfloat16)

    const = lambda b: (0, 0)                                     # resident (weight) blocks
    out = pl.pallas_call(
        mixprop_dlinear_kernel,
        out_shape=jax.ShapeDtypeStruct((B, H, OUT_NODES), jnp.float32),
        grid=(B,),
        in_specs=[
            pl.BlockSpec((None, T * F, N), lambda b: (b, 0, 0)),       # per-batch x tile
            pl.BlockSpec((N, N), const),                               # adjacency (resident)
            pl.BlockSpec((T * C_RES, T * F), const),                   # start_conv fold
            pl.BlockSpec(((GDEP + 1) * H, T * C_RES), const),          # hop-stacked weights
            pl.BlockSpec((H, 1), const),                               # folded bias
        ],
        out_specs=pl.BlockSpec((None, H, OUT_NODES), lambda b: (b, 0, 0)),
        compiler_params=pltpu.CompilerParams(
            dimension_semantics=("parallel",)),
        # At production B / N: also tile N and raise vmem_limit_bytes to ~2x the tiles.
    )(xT, aT, a1T, wallT, biasT)
    return out                                                   # (B, H, OUT_NODES)


# ------------------------------ plain-JAX reference (check) ---------------------------
def reference_forward(batch_x, adj_mx, p):
    inputs = _prepare_input(batch_x)                             # (B, N, T, F)
    inputs = jnp.transpose(inputs, (0, 3, 1, 2))                 # (B, F, N, T)
    x = jnp.einsum('bfnt,cf->bcnt', inputs, p['w_start']) + p['b_start'][None, :, None, None]
    adj = adj_mx + jnp.eye(N, dtype=adj_mx.dtype)
    a = adj / jnp.sum(adj, axis=1, keepdims=True)
    h = x
    outs = [h]
    for _ in range(GDEP):
        h = ALPHA * x + (1 - ALPHA) * jnp.einsum('bcwt,vw->bcvt', h, a)
        outs.append(h)
    ho = jnp.concatenate(outs, axis=1)
    y = jnp.einsum('bcnt,oc->bont', ho, p['w_mlp']) + p['b_mlp'][None, :, None, None]   # (B,O,N,T)
    pad = (KS - 1) // 2
    padded = jnp.concatenate([jnp.repeat(y[..., :1], pad, axis=-1), y,
                              jnp.repeat(y[..., -1:], pad, axis=-1)], axis=-1)
    trend = sum(padded[..., k:k + T] for k in range(KS)) / KS
    seasonal = y - trend
    s_out = jnp.einsum('bonl,hl->bonh', seasonal, p['w_s']) + p['b_s']
    t_out = jnp.einsum('bonl,hl->bonh', trend, p['w_t']) + p['b_t']
    z = s_out + t_out                                            # (B, O, N, H)
    z = jnp.transpose(z, (0, 2, 1, 3))                           # (B, N, O, H)
    z = jnp.transpose(z, (0, 1, 3, 2))                           # (B, N, H, O)
    z = jnp.einsum('bnho,jo->bnhj', z, p['w_f1']) + p['b_f1']
    z = jnp.einsum('bnhj,kj->bnhk', z, p['w_f2']) + p['b_f2']
    z = z[..., -1]                                               # (B, N, H)
    return jnp.transpose(z, (0, 2, 1))[..., -OUT_NODES:]


# --------------------------------------- main ------------------------------------------
if __name__ == "__main__":
    key = jax.random.PRNGKey(0)
    ks = jax.random.split(key, 12)

    def rnd(k, shape, scale=0.1):
        return (scale * jax.random.normal(k, shape)).astype(jnp.float32)

    # deterministic synthetic parameters (shapes from the module's __init__)
    p = {
        'w_start': rnd(ks[0], (C_RES, F)),        # Conv2d(F, C_RES, 1x1)
        'b_start': rnd(ks[1], (C_RES,)),
        'w_mlp':   rnd(ks[2], (C_CONV, C_TOT)),   # MixProp mlp: Conv2d((gdep+1)*C_RES, C_CONV, 1x1)
        'b_mlp':   rnd(ks[3], (C_CONV,)),
        'w_s':     jnp.full((H, T), 1.0 / T, jnp.float32),   # Linear_Seasonal weight = 1/Lag * ones
        'b_s':     rnd(ks[4], (H,)),
        'w_t':     jnp.full((H, T), 1.0 / T, jnp.float32),   # Linear_Trend weight = 1/Lag * ones
        'b_t':     rnd(ks[5], (H,)),
        'w_f1':    rnd(ks[6], (6, C_CONV)),       # feature1: Linear(C_CONV, 6)
        'b_f1':    rnd(ks[7], (6,)),
        'w_f2':    rnd(ks[8], (1, 6)),            # feature2: Linear(6, 1)
        'b_f2':    rnd(ks[9], (1,)),
    }
    adj_mx = jax.random.uniform(ks[10], (N, N), dtype=jnp.float32)        # predefined_A
    batch_x = jax.random.normal(ks[11], (B, T, N), dtype=jnp.float32)     # (batch, input_len, num_nodes)

    out = jax.block_until_ready(mixprop_dlinear_pallas(batch_x, adj_mx, p))
    ref = jax.block_until_ready(reference_forward(batch_x, adj_mx, p))

    assert out.shape == (B, H, OUT_NODES)
    # bf16 MXU operands with f32 accumulation vs. an f32 reference -> relaxed tolerance.
    np.testing.assert_allclose(np.asarray(out), np.asarray(ref), rtol=5e-2, atol=5e-3)
    print("KERNEL_OK")
</pallas_src>

<mosaic_0001>
module attributes {stable_mosaic.version = 11 : i64} {
  func.func @mixprop_dlinear_kernel(%arg0: i32, %arg1: memref<1x16x16xbf16, #tpu.memory_space<vmem>>, %arg2: memref<16x16xbf16, #tpu.memory_space<vmem>>, %arg3: memref<64x16xbf16, #tpu.memory_space<vmem>>, %arg4: memref<12x64xbf16, #tpu.memory_space<vmem>>, %arg5: memref<4x1xf32, #tpu.memory_space<vmem>>, %arg6: memref<1x4x8xf32, #tpu.memory_space<vmem>>) attributes {dimension_semantics = [#tpu.dimension_semantics<parallel>], iteration_bounds = array<i64: 2>, scalar_prefetch = 0 : i64, scratch_operands = 0 : i64, tpu.core_type = #tpu.core_type<tc>, window_params = [{transform_indices = @transform_0, window_bounds = array<i64: 1, 16, 16>}, {pipeline_mode = #tpu.pipeline_mode<synchronous>, transform_indices = @transform_1, window_bounds = array<i64: 16, 16>}, {pipeline_mode = #tpu.pipeline_mode<synchronous>, transform_indices = @transform_2, window_bounds = array<i64: 64, 16>}, {pipeline_mode = #tpu.pipeline_mode<synchronous>, transform_indices = @transform_3, window_bounds = array<i64: 12, 64>}, {pipeline_mode = #tpu.pipeline_mode<synchronous>, transform_indices = @transform_4, window_bounds = array<i64: 4, 1>}, {transform_indices = @transform_5, window_bounds = array<i64: 1, 4, 8>}]} {
    %c0 = arith.constant 0 : index
    %c0_0 = arith.constant 0 : index
    %0 = vector.load %arg3[%c0, %c0_0] : memref<64x16xbf16, #tpu.memory_space<vmem>>, vector<64x16xbf16>
    %c0_1 = arith.constant 0 : index
    %c0_2 = arith.constant 0 : index
    %c0_3 = arith.constant 0 : index
    %1 = vector.load %arg1[%c0_1, %c0_2, %c0_3] : memref<1x16x16xbf16, #tpu.memory_space<vmem>>, vector<1x16x16xbf16>
    %2 = vector.shape_cast %1 : vector<1x16x16xbf16> to vector<16x16xbf16>
    %cst = arith.constant dense<0.000000e+00> : vector<64x16xf32>
    %3 = tpu.matmul %0, %2, %cst {dimension_numbers = #tpu.dot_dimension_numbers<[1], [0], [0], [1], [0, 0, 1, 1], [], []>} : vector<64x16xbf16>, vector<16x16xbf16>, vector<64x16xf32> -> vector<64x16xf32>
    %c0_4 = arith.constant 0 : index
    %c0_5 = arith.constant 0 : index
    %4 = vector.load %arg4[%c0_4, %c0_5] : memref<12x64xbf16, #tpu.memory_space<vmem>>, vector<12x64xbf16>
    %5 = arith.truncf %3 : vector<64x16xf32> to vector<64x16xbf16>
    %cst_6 = arith.constant dense<0.000000e+00> : vector<12x16xf32>
    %6 = tpu.matmul %4, %5, %cst_6 {dimension_numbers = #tpu.dot_dimension_numbers<[1], [0], [0], [1], [0, 0, 1, 1], [], []>} : vector<12x64xbf16>, vector<64x16xbf16>, vector<12x16xf32> -> vector<12x16xf32>
    %c0_7 = arith.constant 0 : index
    %c0_8 = arith.constant 0 : index
    %7 = vector.load %arg2[%c0_7, %c0_8] : memref<16x16xbf16, #tpu.memory_space<vmem>>, vector<16x16xbf16>
    %8 = vector.extract_strided_slice %6 {offsets = [0, 0], sizes = [4, 16], strides = [1, 1]} : vector<12x16xf32> to vector<4x16xf32>
    %cst_9 = arith.constant 5.000000e-02 : f32
    %9 = vector.broadcast %cst_9 : f32 to vector<12x16xf32>
    %10 = arith.mulf %9, %6 : vector<12x16xf32>
    %11 = arith.truncf %6 : vector<12x16xf32> to vector<12x16xbf16>
    %cst_10 = arith.constant dense<0.000000e+00> : vector<12x16xf32>
    %12 = tpu.matmul %11, %7, %cst_10 {dimension_numbers = #tpu.dot_dimension_numbers<[1], [0], [0], [1], [0, 0, 1, 1], [], []>} : vector<12x16xbf16>, vector<16x16xbf16>, vector<12x16xf32> -> vector<12x16xf32>
    %cst_11 = arith.constant 0.949999988 : f32
    %13 = vector.broadcast %cst_11 : f32 to vector<12x16xf32>
    %14 = arith.mulf %13, %12 : vector<12x16xf32>
    %15 = arith.addf %10, %14 : vector<12x16xf32>
    %16 = vector.extract_strided_slice %15 {offsets = [4, 0], sizes = [4, 16], strides = [1, 1]} : vector<12x16xf32> to vector<4x16xf32>
    %17 = arith.addf %8, %16 : vector<4x16xf32>
    %cst_12 = arith.constant 5.000000e-02 : f32
    %18 = vector.broadcast %cst_12 : f32 to vector<12x16xf32>
    %19 = arith.mulf %18, %6 : vector<12x16xf32>
    %20 = arith.truncf %15 : vector<12x16xf32> to vector<12x16xbf16>
    %cst_13 = arith.constant dense<0.000000e+00> : vector<12x16xf32>
    %21 = tpu.matmul %20, %7, %cst_13 {dimension_numbers = #tpu.dot_dimension_numbers<[1], [0], [0], [1], [0, 0, 1, 1], [], []>} : vector<12x16xbf16>, vector<16x16xbf16>, vector<12x16xf32> -> vector<12x16xf32>
    %cst_14 = arith.constant 0.949999988 : f32
    %22 = vector.broadcast %cst_14 : f32 to vector<12x16xf32>
    %23 = arith.mulf %22, %21 : vector<12x16xf32>
    %24 = arith.addf %19, %23 : vector<12x16xf32>
    %25 = vector.extract_strided_slice %24 {offsets = [8, 0], sizes = [4, 16], strides = [1, 1]} : vector<12x16xf32> to vector<4x16xf32>
    %26 = arith.addf %17, %25 : vector<4x16xf32>
    %27 = vector.extract_strided_slice %26 {offsets = [0, 8], sizes = [4, 8], strides = [1, 1]} : vector<4x16xf32> to vector<4x8xf32>
    %c0_15 = arith.constant 0 : index
    %c0_16 = arith.constant 0 : index
    %28 = vector.load %arg5[%c0_15, %c0_16] : memref<4x1xf32, #tpu.memory_space<vmem>>, vector<4x1xf32>
    %29 = vector.broadcast %28 : vector<4x1xf32> to vector<4x8xf32>
    %30 = arith.addf %27, %29 : vector<4x8xf32>
    %c0_17 = arith.constant 0 : index
    %c0_18 = arith.constant 0 : index
    %c0_19 = arith.constant 0 : index
    %31 = vector.load %arg6[%c0_17, %c0_18, %c0_19] : memref<1x4x8xf32, #tpu.memory_space<vmem>>, vector<1x4x8xf32>
    %32 = vector.shape_cast %31 : vector<1x4x8xf32> to vector<4x8xf32>
    %33 = vector.shape_cast %30 : vector<4x8xf32> to vector<1x4x8xf32>
    tpu.vector_store %arg6[%c0_17, %c0_18, %c0_19], %33 {strides = array<i32>} : memref<1x4x8xf32, #tpu.memory_space<vmem>>, vector<1x4x8xf32>,
    return
  }
  func.func @transform_0(%arg0: i32) -> (i32, i32, i32) {
    %c0_i32 = arith.constant 0 : i32
    %c0_i32_0 = arith.constant 0 : i32
    %c0_i32_1 = arith.constant 0 : i32
    return %arg0, %c0_i32, %c0_i32_0 : i32, i32, i32
  }
  func.func @transform_1(%arg0: i32) -> (i32, i32) {
    %c0_i32 = arith.constant 0 : i32
    %c0_i32_0 = arith.constant 0 : i32
    %c0_i32_1 = arith.constant 0 : i32
    return %c0_i32, %c0_i32_0 : i32, i32
  }
  func.func @transform_2(%arg0: i32) -> (i32, i32) {
    %c0_i32 = arith.constant 0 : i32
    %c0_i32_0 = arith.constant 0 : i32
    %c0_i32_1 = arith.constant 0 : i32
    return %c0_i32, %c0_i32_0 : i32, i32
  }
  func.func @transform_3(%arg0: i32) -> (i32, i32) {
    %c0_i32 = arith.constant 0 : i32
    %c0_i32_0 = arith.constant 0 : i32
    %c0_i32_1 = arith.constant 0 : i32
    return %c0_i32, %c0_i32_0 : i32, i32
  }
  func.func @transform_4(%arg0: i32) -> (i32, i32) {
    %c0_i32 = arith.constant 0 : i32
    %c0_i32_0 = arith.constant 0 : i32
    %c0_i32_1 = arith.constant 0 : i32
    return %c0_i32, %c0_i32_0 : i32, i32
  }
  func.func @transform_5(%arg0: i32) -> (i32, i32, i32) {
    %c0_i32 = arith.constant 0 : i32
    %c0_i32_0 = arith.constant 0 : i32
    %c0_i32_1 = arith.constant 0 : i32
    return %arg0, %c0_i32, %c0_i32_0 : i32, i32, i32
  }
}

</mosaic_0001>

<llo_original>
// kernel: tpu_custom_call.1
$region0: #{tpu_custom_call.1}
  #allocation0 [shape = 'u32[]', space=smem, size = 0x4, offset = 0x4, fixed_abs, tag = 'smem constant byte address 0x4 - core index']
  #allocation1 [shape = 'u32[144,128]{1,0:T(1,128)}', space=vmem, size = 0x12000, scoped, tag = 'internal scratch']
  %s0 = inlined_call_operand.vmem [shape: bf16[2,16,16], index: 0, kind: input, shape index: {}]
  %s1 = inlined_call_operand.vmem [shape: bf16[16,16], index: 1, kind: input, shape index: {}]
  %s2 = inlined_call_operand.vmem [shape: bf16[64,16], index: 2, kind: input, shape index: {}]
  %s3 = inlined_call_operand.vmem [shape: bf16[12,64], index: 3, kind: input, shape index: {}]
  %s4 = inlined_call_operand.vmem [shape: f32[4,1], index: 4, kind: input, shape index: {}]
  %s5 = inlined_call_operand.hbm [shape: f32[2,4,8], index: 5, kind: output, shape index: {}]
  %s6 = sld [smem:[#allocation0]]
  $region53: #{tpu_custom_call.1} parent=0
    _
  %s8 = ssub.s32 1, %s6
  %s9 = scalar_select 0, %s8, %s6
  $region1: #{tpu_custom_call.1} parent=0
    #allocation2 [shape = 'u8[4096]{0}', space=vmem, size = 0x1000, scoped, tag = 'output window, operand 0']
    #allocation3 [shape = 's32[2]{0}', space=sflag, size = 0x8, scoped, tag = 'scoped memory for tpu_custom_call.1']
    %10 = vsyncpa [#allocation3], 0
    %s11 = scalar_lea.sflag [#allocation3], 1
    %12 = vsyncpa %s11, 0
    loop: start=0, step=1, limit=4
    $region2: #{tpu_custom_call.1} parent=1 // loop_pre_header
      _
    $region3: #{tpu_custom_call.1} parent=1 // loop_header
      %s14 = sphi 0, %s18
      %p15 = scmp.ge.s32.totalorder %s14, 4
      %s24 = sphi 0, %s26
      %s27 = sphi 0, %s24
      %s28 = sphi 0, %s27
      %s44 = sphi 0, %s28
      %s48 = sphi 0, %s48
      %s50 = sphi 0, %s48
      %s51 = sphi 0, %s50
      %s65 = sphi 0, %s51
      %s69 = sphi 0, %s69
      %s71 = sphi 0, %s69
      %s72 = sphi 0, %s71
      %s86 = sphi 0, %s72
      %s90 = sphi 0, %s90
      %s92 = sphi 0, %s90
      %s93 = sphi 0, %s92
      %s107 = sphi 0, %s93
      %s111 = sphi 0, %s111
      %s113 = sphi 0, %s111
      %s114 = sphi 0, %s113
      %s128 = sphi 0, %s114
      %s134 = sphi 0, %s136
      %s137 = sphi 0, %s134
      %s138 = sphi 0, %s137
      %s154 = sphi 0, %s138
    $region4: #{tpu_custom_call.1} parent=1 // loop_header_branch
      %17 = sbr.rel (%p15) target = $region8
    $region5: #{tpu_custom_call.1} parent=1 // loop_body
      %s19 = ssub.s32 %s14, 1
      %s20 = ssub.s32 %s14, 2
      %s21 = sadd.s32 %s14, 1
      %s22 = ssub.s32 %s14, %s21
      %p23 = scmp.eq.s32.totalorder %s22, 0
      %s25 = sadd.s32 %s24, 1
      %s26 = scalar_select %p23, %s24, %s25
      %p29 = pneg %p23
      %p30 = scmp.eq.s32.totalorder %s14, 1
      %p31 = por %p29, %p30
      %p32 = scmp.ne.s32.totalorder %s24, %s27
      %p33 = scmp.eq.s32.totalorder %s14, 0
      %p34 = por %p32, %p33
      %p35 = scmp.ne.s32.totalorder %s24, %s27
      %p36 = scmp.eq.s32.totalorder %s19, 1
      %p37 = por %p35, %p36
      %p38 = scmp.ne.s32.totalorder %s27, %s28
      %p39 = scmp.eq.s32.totalorder %s19, 0
      %p40 = por %p38, %p39
      %p41 = scmp.ne.s32.totalorder %s27, %s28
      %p42 = scmp.eq.s32.totalorder %s20, 1
      %p43 = por %p41, %p42
      %p45 = scmp.ne.s32.totalorder %s28, %s44
      %p46 = scmp.eq.s32.totalorder %s20, 0
      %p47 = por %p45, %p46
      %s49 = sadd.s32 %s48, 1
      %p52 = scmp.eq.s32.totalorder %s14, 1
      %p53 = scmp.ne.s32.totalorder %s48, %s50
      %p54 = scmp.eq.s32.totalorder %s14, 0
      %p55 = por %p53, %p54
      %p56 = scmp.ne.s32.totalorder %s48, %s50
      %p57 = scmp.eq.s32.totalorder %s19, 1
      %p58 = por %p56, %p57
      %p59 = scmp.ne.s32.totalorder %s50, %s51
      %p60 = scmp.eq.s32.totalorder %s19, 0
      %p61 = por %p59, %p60
      %p62 = scmp.ne.s32.totalorder %s50, %s51
      %p63 = scmp.eq.s32.totalorder %s20, 1
      %p64 = por %p62, %p63
      %p66 = scmp.ne.s32.totalorder %s51, %s65
      %p67 = scmp.eq.s32.totalorder %s20, 0
      %p68 = por %p66, %p67
      %s70 = sadd.s32 %s69, 1
      %p73 = scmp.eq.s32.totalorder %s14, 1
      %p74 = scmp.ne.s32.totalorder %s69, %s71
      %p75 = scmp.eq.s32.totalorder %s14, 0
      %p76 = por %p74, %p75
      %p77 = scmp.ne.s32.totalorder %s69, %s71
      %p78 = scmp.eq.s32.totalorder %s19, 1
      %p79 = por %p77, %p78
      %p80 = scmp.ne.s32.totalorder %s71, %s72
      %p81 = scmp.eq.s32.totalorder %s19, 0
      %p82 = por %p80, %p81
      %p83 = scmp.ne.s32.totalorder %s71, %s72
      %p84 = scmp.eq.s32.totalorder %s20, 1
      %p85 = por %p83, %p84
      %p87 = scmp.ne.s32.totalorder %s72, %s86
      %p88 = scmp.eq.s32.totalorder %s20, 0
      %p89 = por %p87, %p88
      %s91 = sadd.s32 %s90, 1
      %p94 = scmp.eq.s32.totalorder %s14, 1
      %p95 = scmp.ne.s32.totalorder %s90, %s92
      %p96 = scmp.eq.s32.totalorder %s14, 0
      %p97 = por %p95, %p96
      %p98 = scmp.ne.s32.totalorder %s90, %s92
      %p99 = scmp.eq.s32.totalorder %s19, 1
      %p100 = por %p98, %p99
      %p101 = scmp.ne.s32.totalorder %s92, %s93
      %p102 = scmp.eq.s32.totalorder %s19, 0
      %p103 = por %p101, %p102
      %p104 = scmp.ne.s32.totalorder %s92, %s93
      %p105 = scmp.eq.s32.totalorder %s20, 1
      %p106 = por %p104, %p105
      %p108 = scmp.ne.s32.totalorder %s93, %s107
      %p109 = scmp.eq.s32.totalorder %s20, 0
      %p110 = por %p108, %p109
      %s112 = sadd.s32 %s111, 1
      %p115 = scmp.eq.s32.totalorder %s14, 1
      %p116 = scmp.ne.s32.totalorder %s111, %s113
      %p117 = scmp.eq.s32.totalorder %s14, 0
      %p118 = por %p116, %p117
      %p119 = scmp.ne.s32.totalorder %s111, %s113
      %p120 = scmp.eq.s32.totalorder %s19, 1
      %p121 = por %p119, %p120
      %p122 = scmp.ne.s32.totalorder %s113, %s114
      %p123 = scmp.eq.s32.totalorder %s19, 0
      %p124 = por %p122, %p123
      %p125 = scmp.ne.s32.totalorder %s113, %s114
      %p126 = scmp.eq.s32.totalorder %s20, 1
      %p127 = por %p125, %p126
      %p129 = scmp.ne.s32.totalorder %s114, %s128
      %p130 = scmp.eq.s32.totalorder %s20, 0
      %p131 = por %p129, %p130
      %s132 = ssub.s32 %s14, %s21
      %p133 = scmp.eq.s32.totalorder %s132, 0
      %s135 = sadd.s32 %s134, 1
      %s136 = scalar_select %p133, %s134, %s135
      %p139 = pneg %p133
      %p140 = scmp.eq.s32.totalorder %s14, 1
      %p141 = por %p139, %p140
      %p142 = scmp.ne.s32.totalorder %s134, %s137
      %p143 = scmp.eq.s32.totalorder %s14, 0
      %p144 = por %p142, %p143
      %p145 = scmp.ne.s32.totalorder %s134, %s137
      %p146 = scmp.eq.s32.totalorder %s19, 1
      %p147 = por %p145, %p146
      %p148 = scmp.ne.s32.totalorder %s137, %s138
      %p149 = scmp.eq.s32.totalorder %s19, 0
      %p150 = por %p148, %p149
      %p151 = scmp.ne.s32.totalorder %s137, %s138
      %p152 = scmp.eq.s32.totalorder %s20, 1
      %p153 = por %p151, %p152
      %p155 = scmp.ne.s32.totalorder %s138, %s154
      %p156 = scmp.eq.s32.totalorder %s20, 0
      %p157 = por %p155, %p156
      %p158 = scmp.le.s32.totalorder 1, %s14
      %p159 = scmp.lt.s32.totalorder %s14, 3
      %p160 = pnand %p158, %p159
      %p161 = pneg %p160
      // Predicated region
      $region9: #{tpu_custom_call.1} parent=5 // pred_check
        _
      $region10: #{tpu_custom_call.1} parent=5 // pred_check_branch
        %163 = sbr.rel (%p160) target = $region12
      $region11: #{tpu_custom_call.1} parent=5 // pred_region
        %s164 = ssub.s32 %s14, 1
        // Predicated region
        $region13: #{tpu_custom_call.1} parent=11 // pred_check
          %p165 = pneg %p61
        $region14: #{tpu_custom_call.1} parent=11 // pred_check_branch
          %167 = sbr.rel (%p165) target = $region16
        $region15: #{tpu_custom_call.1} parent=11 // pred_region
          _
        $region16: #{tpu_custom_call.1} parent=11 // pred_fallthru
          _
        // Predicated region
        $region17: #{tpu_custom_call.1} parent=11 // pred_check
          %p168 = pneg %p82
        $region18: #{tpu_custom_call.1} parent=11 // pred_check_branch
          %170 = sbr.rel (%p168) target = $region20
        $region19: #{tpu_custom_call.1} parent=11 // pred_region
          _
        $region20: #{tpu_custom_call.1} parent=11 // pred_fallthru
          _
        // Predicated region
        $region21: #{tpu_custom_call.1} parent=11 // pred_check
          %p171 = pneg %p103
        $region22: #{tpu_custom_call.1} parent=11 // pred_check_branch
          %173 = sbr.rel (%p171) target = $region24
        $region23: #{tpu_custom_call.1} parent=11 // pred_region
          _
        $region24: #{tpu_custom_call.1} parent=11 // pred_fallthru
          _
        // Predicated region
        $region25: #{tpu_custom_call.1} parent=11 // pred_check
          %p174 = pneg %p124
        $region26: #{tpu_custom_call.1} parent=11 // pred_check_branch
          %176 = sbr.rel (%p174) target = $region28
        $region27: #{tpu_custom_call.1} parent=11 // pred_region
          _
        $region28: #{tpu_custom_call.1} parent=11 // pred_fallthru
          _
      $region12: #{tpu_custom_call.1} parent=5 // pred_fallthru
        _
      %p177 = scmp.lt.s32.totalorder %s14, 2
      // Predicated region
      $region29: #{tpu_custom_call.1} parent=5 // pred_check
        %p178 = pneg %p177
      $region30: #{tpu_custom_call.1} parent=5 // pred_check_branch
        %180 = sbr.rel (%p178) target = $region32
      $region31: #{tpu_custom_call.1} parent=5 // pred_region
        // Predicated region
        $region33: #{tpu_custom_call.1} parent=31 // pred_check
          %p181 = pneg %p34
        $region34: #{tpu_custom_call.1} parent=31 // pred_check_branch
          %183 = sbr.rel (%p181) target = $region36
        $region35: #{tpu_custom_call.1} parent=31 // pred_region
          %p184 = scmp.lt.s32.totalorder %s14, 1
          %s185 = scalar_select %p184, %s14, 1
          %s186 = smul.addr %s185, 2
          %s187 = smul.addr %s186, 4
          %s188 = scalar_lea.vmem %s0, %s187
        $region36: #{tpu_custom_call.1} parent=31 // pred_fallthru
          _
      $region32: #{tpu_custom_call.1} parent=5 // pred_fallthru
        _
      %p189 = scmp.le.s32.totalorder 1, %s14
      %p190 = scmp.lt.s32.totalorder %s14, 3
      %p191 = pnand %p189, %p190
      %p192 = pneg %p191
      // Predicated region
      $region37: #{tpu_custom_call.1} parent=5 // pred_check
        _
      $region38: #{tpu_custom_call.1} parent=5 // pred_check_branch
        %194 = sbr.rel (%p191) target = $region40
      $region39: #{tpu_custom_call.1} parent=5 // pred_region
        %s195 = ssub.s32 %s14, 1
        %p196 = scmp.lt.s32.totalorder %s19, 1
        %s197 = scalar_select %p196, %s19, 1
        %s198 = smul.addr %s197, 2
        %s199 = smul.addr %s198, 4
        %s200 = scalar_lea.vmem %s0, %s199
        %p201 = pneg %p40
        %p202 = pneg %p37
        %p203 = pneg %p61
        %p204 = pneg %p58
        %p205 = pneg %p82
        %p206 = pneg %p79
        %p207 = pneg %p103
        %p208 = pneg %p100
        %p209 = pneg %p124
        %p210 = pneg %p121
        %p211 = pneg %p150
        %p212 = pneg %p147
        %s213 = sand.u32 %s137, 1
        %s214 = scalar_lea.sflag [#allocation3], %s213
        %s215 = sand.u32 %s137, 1
        %s216 = smul.addr %s215, 4
        %s217 = scalar_lea.vmem [#allocation2], %s216
        %p218 = scmp.lt.s32.totalorder %s19, 1
        %s219 = scalar_select %p218, %s19, 1
        %s220 = smul.addr %s219, 2
        %s221 = smul.addr %s220, 4
        %s222 = scalar_lea.vmem %s0, %s221
        %v224 = vld [vmem:[%s2] sm:$0xf]
        %v225 = vld [vmem:[%s2 + $0x4] sm:$0xf]
        %v226 = vld [vmem:[%s2 + $0x8] sm:$0xf]
        %v227 = vld [vmem:[%s2 + $0xc] sm:$0xf]
        %v228 = vld [vmem:[%s2 + $0x10] sm:$0xf]
        %v229 = vld [vmem:[%s2 + $0x14] sm:$0xf]
        %v230 = vld [vmem:[%s2 + $0x18] sm:$0xf]
        %v231 = vld [vmem:[%s2 + $0x1c] sm:$0xf]
        %v232 = vld [vmem:[%s222] sm:$0xf]
        %v233 = vld [vmem:[%s222 + $0x4] sm:$0xf]
        %v242 = vunpack.c.l.b16 %v224
        %v243 = vunpack.c.l.b16 %v225
        %v244 = vunpack.c.l.b16 %v226
        %v245 = vunpack.c.l.b16 %v227
        %v246 = vunpack.c.l.b16 %v228
        %v247 = vunpack.c.l.b16 %v229
        %v248 = vunpack.c.l.b16 %v230
        %v249 = vunpack.c.l.b16 %v231
        %v250 = vpack.c.b16 %v243, %v242
        %v251 = vpack.c.b16 %v245, %v244
        %v252 = vpack.c.b16 %v247, %v246
        %v253 = vpack.c.b16 %v249, %v248
        %v256 = vunpack.c.l.b16 %v232
        %v257 = vunpack.c.l.b16 %v233
        %v258 = vpack.c.b16 %v257, %v256
        %vm260 = vcmask 130048
        %v262 = vsel %vm260, %v250, 0
        %v265 = vsel %vm260, %v251, 0
        %v268 = vsel %vm260, %v252, 0
        %v271 = vsel %vm260, %v253, 0
        %273 = vmatprep.subr.bf16.mxu0 0
        %274 = vmatpush1.bf16.msra.mxu0 0
        %275 = vmatprep.subr.bf16.mxu0 0
        %276 = vmatpush1.bf16.msra.mxu0 0
        %277 = vmatprep.subr.bf16.mxu0 0
        %278 = vmatpush1.bf16.msra.mxu0 0
        %279 = vmatprep.subr.bf16.mxu0 0
        %280 = vmatpush1.bf16.msra.mxu0 0
        %281 = vmatprep.subr.bf16.mxu0 0
        %282 = vmatpush1.bf16.msra.mxu0 0
        %283 = vmatprep.subr.bf16.mxu0 0
        %284 = vmatpush1.bf16.msra.mxu0 0
        %285 = vmatprep.subr.bf16.mxu0 0
        %286 = vmatpush1.bf16.msra.mxu0 0
        %287 = vmatprep.subr.bf16.mxu0 0
        %288 = vmatpush1.bf16.msra.mxu0 %v258
        %289 = vmatprep.subr.bf16.mxu0 0
        %290 = vmatpush2.bf16.msra.mxu0 0
        %291 = vmatprep.subr.bf16.mxu0 0
        %292 = vmatpush2.bf16.msra.mxu0 0
        %293 = vmatprep.subr.bf16.mxu0 0
        %294 = vmatpush2.bf16.msra.mxu0 0
        %295 = vmatprep.subr.bf16.mxu0 0
        %296 = vmatpush2.bf16.msra.mxu0 0
        %297 = vmatprep.subr.bf16.mxu0 0
        %298 = vmatpush2.bf16.msra.mxu0 0
        %299 = vmatprep.subr.bf16.mxu0 0
        %300 = vmatpush2.bf16.msra.mxu0 0
        %301 = vmatprep.subr.bf16.mxu0 0
        %302 = vmatpush2.bf16.msra.mxu0 0
        %303 = vmatprep.subr.bf16.mxu0 0
        %304 = vmatpush2.bf16.msra.mxu0 0
        %305 = vmatprep.mubr.bf16.mxu0 0
        %306 = vmatmul.mubr.bf16.gmra.mxu0 %v262
        %v307 = vpop.f32.mrf.mxu0
        %v308 = vadd.f32 0.0, %v307
        %v309 = vpop.f32.mrf.mxu0
        %v310 = vpop.f32.mrf.mxu0
        %v311 = vadd.f32 0.0, %v310
        %v312 = vpop.f32.mrf.mxu0
        %313 = vmatprep.mubr.bf16.mxu0 0
        %314 = vmatmul.mubr.bf16.gmra.mxu0 %v265
        %v315 = vpop.f32.mrf.mxu0
        %v316 = vadd.f32 0.0, %v315
        %v317 = vpop.f32.mrf.mxu0
        %v318 = vpop.f32.mrf.mxu0
        %v319 = vadd.f32 0.0, %v318
        %v320 = vpop.f32.mrf.mxu0
        %321 = vmatprep.mubr.bf16.mxu0 0
        %322 = vmatmul.mubr.bf16.gmra.mxu0 %v268
        %v323 = vpop.f32.mrf.mxu0
        %v324 = vadd.f32 0.0, %v323
        %v325 = vpop.f32.mrf.mxu0
        %v326 = vpop.f32.mrf.mxu0
        %v327 = vadd.f32 0.0, %v326
        %v328 = vpop.f32.mrf.mxu0
        %329 = vmatprep.mubr.bf16.mxu0 0
        %330 = vmatmul.mubr.bf16.gmra.mxu0 %v271
        %v331 = vpop.f32.mrf.mxu0
        %v332 = vadd.f32 0.0, %v331
        %v333 = vpop.f32.mrf.mxu0
        %v334 = vpop.f32.mrf.mxu0
        %v335 = vadd.f32 0.0, %v334
        %v336 = vpop.f32.mrf.mxu0
        %337 = vdwg.mxu0
        %v338 = vld [vmem:[%s3] sm:$0xf]
        %v339 = vld [vmem:[%s3 + $0x4] sm:$0x3]
        %v340 = vpack.c.bf16 %v311, %v308
        %v341 = vpack.c.bf16 %v319, %v316
        %v342 = vpack.c.bf16 %v327, %v324
        %v343 = vpack.c.bf16 %v335, %v332
        %v346 = vunpack.c.l.b16 %v338
        %v347 = vunpack.c.l.b16 %v339
        %v348 = vpack.c.b16 %v347, %v346
        %vm349 = vcmask 523264
        %v351 = vsel %vm349, %v348, 0
        %353 = vmatprep.subr.bf16.mxu0 0
        %354 = vmatpush1.bf16.msra.mxu0 0
        %355 = vmatprep.subr.bf16.mxu0 0
        %356 = vmatpush1.bf16.msra.mxu0 0
        %357 = vmatprep.subr.bf16.mxu0 0
        %358 = vmatpush1.bf16.msra.mxu0 0
        %359 = vmatprep.subr.bf16.mxu0 0
        %360 = vmatpush1.bf16.msra.mxu0 0
        %361 = vmatprep.subr.bf16.mxu0 0
        %362 = vmatpush1.bf16.msra.mxu0 %v343
        %363 = vmatprep.subr.bf16.mxu0 0
        %364 = vmatpush1.bf16.msra.mxu0 %v342
        %365 = vmatprep.subr.bf16.mxu0 0
        %366 = vmatpush1.bf16.msra.mxu0 %v341
        %367 = vmatprep.subr.bf16.mxu0 0
        %368 = vmatpush1.bf16.msra.mxu0 %v340
        %369 = vmatprep.subr.bf16.mxu0 0
        %370 = vmatpush2.bf16.msra.mxu0 0
        %371 = vmatprep.subr.bf16.mxu0 0
        %372 = vmatpush2.bf16.msra.mxu0 0
        %373 = vmatprep.subr.bf16.mxu0 0
        %374 = vmatpush2.bf16.msra.mxu0 0
        %375 = vmatprep.subr.bf16.mxu0 0
        %376 = vmatpush2.bf16.msra.mxu0 0
        %377 = vmatprep.subr.bf16.mxu0 0
        %378 = vmatpush2.bf16.msra.mxu0 0
        %379 = vmatprep.subr.bf16.mxu0 0
        %380 = vmatpush2.bf16.msra.mxu0 0
        %381 = vmatprep.subr.bf16.mxu0 0
        %382 = vmatpush2.bf16.msra.mxu0 0
        %383 = vmatprep.subr.bf16.mxu0 0
        %384 = vmatpush2.bf16.msra.mxu0 0
        %385 = vmatprep.mubr.bf16.mxu0 0
        %386 = vmatmul.mubr.bf16.gmra.mxu0 %v351
        %v387 = vpop.f32.mrf.mxu0
        %v388 = vadd.f32 0.0, %v387
        %v389 = vpop.f32.mrf.mxu0
        %v390 = vpop.f32.mrf.mxu0
        %v391 = vadd.f32 0.0, %v390
        %v392 = vpop.f32.mrf.mxu0
        %393 = vdwg.mxu0
        %v394 = vld [vmem:[%s1] sm:$0xf]
        %v395 = vld [vmem:[%s1 + $0x4] sm:$0xf]
        %v396 = vmul.f32 %v388, 0.05
        %v397 = vmul.f32 %v391, 0.05
        %v398 = vpack.c.bf16 %v391, %v388
        %v401 = vunpack.c.l.b16 %v394
        %v402 = vunpack.c.l.b16 %v395
        %v403 = vpack.c.b16 %v402, %v401
        %v406 = vsel %vm260, %v398, 0
        %408 = vmatprep.subr.bf16.mxu0 0
        %409 = vmatpush1.bf16.msra.mxu0 0
        %410 = vmatprep.subr.bf16.mxu0 0
        %411 = vmatpush1.bf16.msra.mxu0 0
        %412 = vmatprep.subr.bf16.mxu0 0
        %413 = vmatpush1.bf16.msra.mxu0 0
        %414 = vmatprep.subr.bf16.mxu0 0
        %415 = vmatpush1.bf16.msra.mxu0 0
        %416 = vmatprep.subr.bf16.mxu0 0
        %417 = vmatpush1.bf16.msra.mxu0 0
        %418 = vmatprep.subr.bf16.mxu0 0
        %419 = vmatpush1.bf16.msra.mxu0 0
        %420 = vmatprep.subr.bf16.mxu0 0
        %421 = vmatpush1.bf16.msra.mxu0 0
        %422 = vmatprep.subr.bf16.mxu0 0
        %423 = vmatpush1.bf16.msra.mxu0 %v403
        %424 = vmatprep.subr.bf16.mxu0 0
        %425 = vmatpush2.bf16.msra.mxu0 0
        %426 = vmatprep.subr.bf16.mxu0 0
        %427 = vmatpush2.bf16.msra.mxu0 0
        %428 = vmatprep.subr.bf16.mxu0 0
        %429 = vmatpush2.bf16.msra.mxu0 0
        %430 = vmatprep.subr.bf16.mxu0 0
        %431 = vmatpush2.bf16.msra.mxu0 0
        %432 = vmatprep.subr.bf16.mxu0 0
        %433 = vmatpush2.bf16.msra.mxu0 0
        %434 = vmatprep.subr.bf16.mxu0 0
        %435 = vmatpush2.bf16.msra.mxu0 0
        %436 = vmatprep.subr.bf16.mxu0 0
        %437 = vmatpush2.bf16.msra.mxu0 0
        %438 = vmatprep.subr.bf16.mxu0 0
        %439 = vmatpush2.bf16.msra.mxu0 0
        %440 = vmatprep.mubr.bf16.mxu0 0
        %441 = vmatmul.mubr.bf16.gmra.mxu0 %v406
        %v442 = vpop.f32.mrf.mxu0
        %v443 = vadd.f32 0.0, %v442
        %v444 = vpop.f32.mrf.mxu0
        %v445 = vpop.f32.mrf.mxu0
        %v446 = vadd.f32 0.0, %v445
        %v447 = vpop.f32.mrf.mxu0
        %448 = vdwg.mxu0
        %v449 = vmul.f32 %v443, 0.95
        %v450 = vmul.f32 %v446, 0.95
        %v451 = vadd.f32 %v396, %v449
        %v452 = vadd.f32 %v397, %v450
        %v454 = vrot.slane %v451, 4
        %v456 = vadd.f32 %v388, %v454
        %v457 = vpack.c.bf16 %v452, %v451
        %v459 = vsel %vm260, %v457, 0
        %461 = vmatprep.subr.bf16.mxu0 0
        %462 = vmatpush1.bf16.msra.mxu0 0
        %463 = vmatprep.subr.bf16.mxu0 0
        %464 = vmatpush1.bf16.msra.mxu0 0
        %465 = vmatprep.subr.bf16.mxu0 0
        %466 = vmatpush1.bf16.msra.mxu0 0
        %467 = vmatprep.subr.bf16.mxu0 0
        %468 = vmatpush1.bf16.msra.mxu0 0
        %469 = vmatprep.subr.bf16.mxu0 0
        %470 = vmatpush1.bf16.msra.mxu0 0
        %471 = vmatprep.subr.bf16.mxu0 0
        %472 = vmatpush1.bf16.msra.mxu0 0
        %473 = vmatprep.subr.bf16.mxu0 0
        %474 = vmatpush1.bf16.msra.mxu0 0
        %475 = vmatprep.subr.bf16.mxu0 0
        %476 = vmatpush1.bf16.msra.mxu0 %v403
        %477 = vmatprep.subr.bf16.mxu0 0
        %478 = vmatpush2.bf16.msra.mxu0 0
        %479 = vmatprep.subr.bf16.mxu0 0
        %480 = vmatpush2.bf16.msra.mxu0 0
        %481 = vmatprep.subr.bf16.mxu0 0
        %482 = vmatpush2.bf16.msra.mxu0 0
        %483 = vmatprep.subr.bf16.mxu0 0
        %484 = vmatpush2.bf16.msra.mxu0 0
        %485 = vmatprep.subr.bf16.mxu0 0
        %486 = vmatpush2.bf16.msra.mxu0 0
        %487 = vmatprep.subr.bf16.mxu0 0
        %488 = vmatpush2.bf16.msra.mxu0 0
        %489 = vmatprep.subr.bf16.mxu0 0
        %490 = vmatpush2.bf16.msra.mxu0 0
        %491 = vmatprep.subr.bf16.mxu0 0
        %492 = vmatpush2.bf16.msra.mxu0 0
        %493 = vmatprep.mubr.bf16.mxu0 0
        %494 = vmatmul.mubr.bf16.gmra.mxu0 %v459
        %v495 = vpop.f32.mrf.mxu0
        %v496 = vpop.f32.mrf.mxu0
        %v497 = vpop.f32.mrf.mxu0
        %v498 = vadd.f32 0.0, %v497
        %v499 = vpop.f32.mrf.mxu0
        %500 = vdwg.mxu0
        %v501 = vmul.f32 %v498, 0.95
        %v502 = vadd.f32 %v397, %v501
        %v503 = vadd.f32 %v456, %v502
        %v504 = vld [vmem:[%s4] sm:$0xf]
        %506 = vset.pattern.permute.xlu0 0
        %507 = vperm.xlu0 %506, %v504
        %v508 = vpop.permute.xlu0 %507
        %v510 = vadd.f32 %v503, %v508
        %512 = vrot.lane.b32.xlu0 %v510, 120
        %v513 = vpop.permute.xlu0 %512
        %vm515 = vcmask 60416
        %516 = vst.msk [vmem:[%s217] sm:$0xf] %vm515, %v513
        %s517 = sand.u32 %s137, 1
        %s518 = scalar_lea.sflag [#allocation3], %s517
        %s519 = sand.u32 %s137, 1
        %s520 = smul.addr %s519, 4
        %s521 = scalar_lea.vmem [#allocation2], %s520
        // Predicated region
        $region41: #{tpu_custom_call.1} parent=39 // pred_check
          %p522 = pneg %p147
        $region42: #{tpu_custom_call.1} parent=39 // pred_check_branch
          %524 = sbr.rel (%p522) target = $region44
        $region43: #{tpu_custom_call.1} parent=39 // pred_region
          %s526 = ssub.s32 64, 64
          %527 = vsyncadd %s518, %s526
          %s528 = smul.addr %s19, 64
          %s529 = scalar_lea.hbm %s5, %s528
          %s531 = sshll.u32 %s521, 4
          %s532 = int_to_ptr.vmem [resolvable:$true] %s531
          %534 = dma.vmem_to_hbm [thread:$0]  %s532, 64, %s529, %s518
        $region44: #{tpu_custom_call.1} parent=39 // pred_fallthru
          _
      $region40: #{tpu_custom_call.1} parent=5 // pred_fallthru
        _
      %p535 = scmp.le.s32.totalorder 2, %s14
      // Predicated region
      $region45: #{tpu_custom_call.1} parent=5 // pred_check
        %p536 = pneg %p535
      $region46: #{tpu_custom_call.1} parent=5 // pred_check_branch
        %538 = sbr.rel (%p536) target = $region48
      $region47: #{tpu_custom_call.1} parent=5 // pred_region
        %s539 = ssub.s32 %s14, 2
        // Predicated region
        $region49: #{tpu_custom_call.1} parent=47 // pred_check
          %p540 = pneg %p153
        $region50: #{tpu_custom_call.1} parent=47 // pred_check_branch
          %542 = sbr.rel (%p540) target = $region52
        $region51: #{tpu_custom_call.1} parent=47 // pred_region
          %s543 = sand.u32 %s138, 1
          %s544 = scalar_lea.sflag [#allocation3], %s543
          %s545 = sand.u32 %s138, 1
          %s546 = smul.addr %s545, 4
          %s547 = scalar_lea.vmem [#allocation2], %s546
          %548 = dma.done %s544, 64
        $region52: #{tpu_custom_call.1} parent=47 // pred_fallthru
          _
      $region48: #{tpu_custom_call.1} parent=5 // pred_fallthru
        _
    $region6: #{tpu_custom_call.1} parent=1 // loop_footer
      %s18 = sadd.s32 1, %s14
    $region7: #{tpu_custom_call.1} parent=1 // loop_footer_branch
      %13 = sbr.rel target = $region3
    $region8: #{tpu_custom_call.1} parent=1 // loop_exit
      _
    %549 = vsyncpa [#allocation3], 1
    %s550 = scalar_lea.sflag [#allocation3], 1
    %551 = vsyncpa %s550, 1

</llo_original>
